<compile_context>
chip_gen: v5e
topology: v5e:2x2
jax: 0.10.0
libtpu: 0.0.40
codegen_flags: <defaults>
</compile_context>

<pallas_src>
import jax
import jax.numpy as jnp
from jax.experimental import pallas as pl
from jax.experimental.pallas import tpu as pltpu


def dqn_mlp_kernel(x_ref, w1_ref, b1_ref, w2_ref, b2_ref, w3_ref, b3_ref, o_ref):
    # Fused hot path: 3 MXU matmuls (f32 accumulation) + f32 bias adds + ReLUs, all in VMEM.
    # With hidden=128 this cannot be MXU-bound on v6e/v7x (256-wide MXU); the binding path is
    # DMA/overhead, which the wrapper-level tiling choices optimize.
    mm_dtype = w1_ref.dtype                       # f32 or bf16; activations cast in-kernel.
    x = x_ref[...].astype(mm_dtype)
    h1 = jnp.dot(x, w1_ref[...], preferred_element_type=jnp.float32) + b1_ref[...]
    h1 = jnp.maximum(h1, 0.0)
    h2 = jnp.dot(h1.astype(mm_dtype), w2_ref[...], preferred_element_type=jnp.float32) + b2_ref[...]
    h2 = jnp.maximum(h2, 0.0)
    out = jnp.dot(h2.astype(mm_dtype), w3_ref[...], preferred_element_type=jnp.float32) + b3_ref[...]
    o_ref[...] = out.astype(o_ref.dtype)
    # TODO(synk): if a bundle profile shows the vld/vst slots saturating at very large batch tiles,
    # split the tile with an inner lax.fori_loop over ~256-row sub-tiles here.


def _round_up(n, m):
    return (n + m - 1) // m * m


def prepare_params(params, *, use_bf16=True, pad_output_lanes=False):
    """One-time parameter prep, hoisted out of the per-call forward hot path.

    - use_bf16: store weights bf16 (MXU-native on v5e/v6e/v7x, halves resident weight bytes);
      biases stay f32 so the bias-add/ReLU epilogue is f32 everywhere (v5e has no bf16 VPU).
      Do NOT use int8 weights as the narrow format -- the v7x MXU has no integer path (fp8 only).
    - pad_output_lanes: zero-pad w3/b3 columns to a multiple of 128 for an unmasked lane-dense
      output store.  Only worth it for small/latency-bound batches; the default narrow output
      avoids a 32x HBM write amplification for large batches.
    """
    w1, b1 = params["w1"], params["b1"]
    w2, b2 = params["w2"], params["b2"]
    w3, b3 = params["w3"], params["b3"]
    if pad_output_lanes:
        out_size = w3.shape[1]
        n_pad = _round_up(out_size, 128)
        if n_pad != out_size:
            w3 = jnp.pad(w3, ((0, 0), (0, n_pad - out_size)))
            b3 = jnp.pad(b3, ((0, 0), (0, n_pad - out_size)))
    mm_dtype = jnp.bfloat16 if use_bf16 else jnp.float32
    w1, w2, w3 = (w.astype(mm_dtype) for w in (w1, w2, w3))
    b1, b2, b3 = (b.astype(jnp.float32) for b in (b1, b2, b3))
    return {"w1": w1, "b1": b1, "w2": w2, "b2": b2, "w3": w3, "b3": b3}


def _resident_spec(shape):
    # Full-array block with a constant index map: DMA'd once, resident across the grid.
    ndim = len(shape)

    def index_map(i):
        return (0,) * ndim

    return pl.BlockSpec(shape, index_map)


def dqn_forward(x, params, *, out_size=None, block_b=2048, min_grid_steps=4):
    """x: (B, input_size) f32.  params: output of prepare_params (or raw f32 params).

    Returns (B, out_size) f32 Q-values.  `out_size` only needs to be given when the params were
    prepared with pad_output_lanes=True (to slice off the zero pad columns).
    """
    w1, b1 = params["w1"], params["b1"]
    w2, b2 = params["w2"], params["b2"]
    w3, b3 = params["w3"], params["b3"]

    B, in_size = x.shape
    n_out = w3.shape[1]
    hidden = w1.shape[1]
    if out_size is None:
        out_size = n_out

    # Batch tile: large enough to amortize per-step overhead / lengthen DMAs, but capped so the
    # "parallel" batch axis keeps >= min_grid_steps grid steps (megacore / v7x 2nd TensorCore).
    tb = _round_up(max(block_b, 8), 8)
    cap = _round_up(pl.cdiv(B, max(min_grid_steps, 1)), 8)
    tb = max(8, min(tb, cap))
    grid = (pl.cdiv(B, tb),)  # ragged final block; rows past B are never written back

    # Explicit scoped-VMEM budget (v5e default is only 16 MiB): double-buffered x/out tiles +
    # f32 h1/h2 intermediates + resident weights, with 2x headroom, capped at v7x's 64 MiB.
    w_bytes = sum(int(a.size) * a.dtype.itemsize for a in (w1, b1, w2, b2, w3, b3))
    tile_bytes = 2 * tb * (in_size * x.dtype.itemsize + n_out * 4) + 2 * tb * hidden * 4
    vmem_limit = int(min(64 << 20, max(32 << 20, 2 * (tile_bytes + 2 * w_bytes))))

    out = pl.pallas_call(
        dqn_mlp_kernel,
        out_shape=jax.ShapeDtypeStruct((B, n_out), jnp.float32),
        grid_spec=pl.GridSpec(
            grid=grid,
            in_specs=[
                pl.BlockSpec((tb, in_size), lambda i: (i, 0)),  # x: streamed per batch tile (f32)
                _resident_spec(w1.shape), _resident_spec(b1.shape),
                _resident_spec(w2.shape), _resident_spec(b2.shape),
                _resident_spec(w3.shape), _resident_spec(b3.shape),
            ],
            out_specs=pl.BlockSpec((tb, n_out), lambda i: (i, 0)),
        ),
        compiler_params=pltpu.CompilerParams(
            dimension_semantics=("parallel",),
            vmem_limit_bytes=vmem_limit,
        ),
    )(x, w1, b1, w2, b2, w3, b3)

    return out if out_size == n_out else out[:, :out_size]


def init_params(key, input_size, output_size, hidden=128):
    """Deterministic init matching PyTorch nn.Linear default: U(-1/sqrt(fan_in), 1/sqrt(fan_in))."""
    keys = jax.random.split(key, 6)

    def linear(kw, kb, fan_in, fan_out):
        bound = 1.0 / jnp.sqrt(jnp.float32(fan_in))
        w = jax.random.uniform(kw, (fan_in, fan_out), jnp.float32, -bound, bound)
        b = jax.random.uniform(kb, (1, fan_out), jnp.float32, -bound, bound)
        return w, b

    w1, b1 = linear(keys[0], keys[1], input_size, hidden)
    w2, b2 = linear(keys[2], keys[3], hidden, hidden)
    w3, b3 = linear(keys[4], keys[5], hidden, output_size)
    return {"w1": w1, "b1": b1, "w2": w2, "b2": b2, "w3": w3, "b3": b3}


def dqn_forward_ref(x, p):
    h1 = jnp.maximum(x @ p["w1"] + p["b1"], 0.0)
    h2 = jnp.maximum(h1 @ p["w2"] + p["b2"], 0.0)
    return h2 @ p["w3"] + p["b3"]


# TODO(synk): save_model/load_model (torch.save / torch.load checkpoint I/O) has no Pallas
# equivalent; parameter (de)serialization is left to the surrounding framework.

if __name__ == "__main__":
    key = jax.random.PRNGKey(0)
    k_param, k_x1, k_x2 = jax.random.split(key, 3)

    input_size = 32   # e.g. flattened state vector
    output_size = 4   # e.g. number of discrete actions
    raw_params = init_params(k_param, input_size, output_size)

    x_small = jax.random.normal(k_x1, (8, input_size), jnp.float32)
    x_mid = jax.random.normal(k_x2, (20, input_size), jnp.float32)
    ref_small = dqn_forward_ref(x_small, raw_params)
    ref_mid = dqn_forward_ref(x_mid, raw_params)

    # 1) Exact f32 path, single grid step, native narrow output.
    p_f32 = prepare_params(raw_params, use_bf16=False)
    out = jax.block_until_ready(dqn_forward(x_small, p_f32))
    assert out.shape == (8, output_size)
    assert jnp.allclose(out, ref_small, atol=1e-4, rtol=1e-4)

    # 2) Batch not a multiple of the tile -> multi-step "parallel" grid with a ragged final block
    #    (no wrapper-side x pad; out-of-range rows are never written back).
    out_mid = jax.block_until_ready(dqn_forward(x_mid, p_f32, block_b=8))
    assert out_mid.shape == (20, output_size)
    assert jnp.allclose(out_mid, ref_mid, atol=1e-4, rtol=1e-4)

    # 3) Default prep: bf16 matmul inputs (f32 accumulate + f32 bias/ReLU epilogue); looser tol.
    p_bf16 = prepare_params(raw_params)
    out_bf16 = jax.block_until_ready(dqn_forward(x_small, p_bf16))
    assert out_bf16.shape == (8, output_size)
    assert jnp.allclose(out_bf16, ref_small, atol=5e-2, rtol=5e-2)

    # 4) Lane-dense padded-output variant (for small / latency-bound batches), padded in
    #    prepare_params (hoisted) and sliced back to output_size here.
    p_pad = prepare_params(raw_params, use_bf16=False, pad_output_lanes=True)
    out_pad = jax.block_until_ready(dqn_forward(x_mid, p_pad, out_size=output_size, block_b=8))
    assert out_pad.shape == (20, output_size)
    assert jnp.allclose(out_pad, ref_mid, atol=1e-4, rtol=1e-4)

    print("KERNEL_OK")
</pallas_src>

<mosaic_0001>
module attributes {stable_mosaic.version = 11 : i64} {
  func.func @dqn_mlp_kernel(%arg0: i32, %arg1: memref<8x32xf32, #tpu.memory_space<vmem>>, %arg2: memref<32x128xf32, #tpu.memory_space<vmem>>, %arg3: memref<1x128xf32, #tpu.memory_space<vmem>>, %arg4: memref<128x128xf32, #tpu.memory_space<vmem>>, %arg5: memref<1x128xf32, #tpu.memory_space<vmem>>, %arg6: memref<128x4xf32, #tpu.memory_space<vmem>>, %arg7: memref<1x4xf32, #tpu.memory_space<vmem>>, %arg8: memref<8x4xf32, #tpu.memory_space<vmem>>) attributes {dimension_semantics = [#tpu.dimension_semantics<parallel>], iteration_bounds = array<i64: 1>, scalar_prefetch = 0 : i64, scratch_operands = 0 : i64, tpu.core_type = #tpu.core_type<tc>, window_params = [{transform_indices = @transform_0, window_bounds = array<i64: 8, 32>}, {pipeline_mode = #tpu.pipeline_mode<synchronous>, transform_indices = @transform_1, window_bounds = array<i64: 32, 128>}, {pipeline_mode = #tpu.pipeline_mode<synchronous>, transform_indices = @transform_2, window_bounds = array<i64: 1, 128>}, {pipeline_mode = #tpu.pipeline_mode<synchronous>, transform_indices = @transform_3, window_bounds = array<i64: 128, 128>}, {pipeline_mode = #tpu.pipeline_mode<synchronous>, transform_indices = @transform_4, window_bounds = array<i64: 1, 128>}, {pipeline_mode = #tpu.pipeline_mode<synchronous>, transform_indices = @transform_5, window_bounds = array<i64: 128, 4>}, {pipeline_mode = #tpu.pipeline_mode<synchronous>, transform_indices = @transform_6, window_bounds = array<i64: 1, 4>}, {transform_indices = @transform_7, window_bounds = array<i64: 8, 4>}]} {
    %c0 = arith.constant 0 : index
    %c0_0 = arith.constant 0 : index
    %0 = vector.load %arg1[%c0, %c0_0] : memref<8x32xf32, #tpu.memory_space<vmem>>, vector<8x32xf32>
    %c0_1 = arith.constant 0 : index
    %c0_2 = arith.constant 0 : index
    %1 = vector.load %arg2[%c0_1, %c0_2] : memref<32x128xf32, #tpu.memory_space<vmem>>, vector<32x128xf32>
    %cst = arith.constant dense<0.000000e+00> : vector<8x128xf32>
    %2 = tpu.matmul %0, %1, %cst {dimension_numbers = #tpu.dot_dimension_numbers<[1], [0], [0], [1], [0, 0, 1, 1], [], []>} : vector<8x32xf32>, vector<32x128xf32>, vector<8x128xf32> -> vector<8x128xf32>
    %c0_3 = arith.constant 0 : index
    %c0_4 = arith.constant 0 : index
    %3 = vector.load %arg3[%c0_3, %c0_4] : memref<1x128xf32, #tpu.memory_space<vmem>>, vector<1x128xf32>
    %4 = vector.broadcast %3 : vector<1x128xf32> to vector<8x128xf32>
    %5 = arith.addf %2, %4 : vector<8x128xf32>
    %cst_5 = arith.constant 0.000000e+00 : f32
    %6 = vector.broadcast %cst_5 : f32 to vector<8x128xf32>
    %7 = arith.maximumf %5, %6 : vector<8x128xf32>
    %c0_6 = arith.constant 0 : index
    %c0_7 = arith.constant 0 : index
    %8 = vector.load %arg4[%c0_6, %c0_7] : memref<128x128xf32, #tpu.memory_space<vmem>>, vector<128x128xf32>
    %cst_8 = arith.constant dense<0.000000e+00> : vector<8x128xf32>
    %9 = tpu.matmul %7, %8, %cst_8 {dimension_numbers = #tpu.dot_dimension_numbers<[1], [0], [0], [1], [0, 0, 1, 1], [], []>} : vector<8x128xf32>, vector<128x128xf32>, vector<8x128xf32> -> vector<8x128xf32>
    %c0_9 = arith.constant 0 : index
    %c0_10 = arith.constant 0 : index
    %10 = vector.load %arg5[%c0_9, %c0_10] : memref<1x128xf32, #tpu.memory_space<vmem>>, vector<1x128xf32>
    %11 = vector.broadcast %10 : vector<1x128xf32> to vector<8x128xf32>
    %12 = arith.addf %9, %11 : vector<8x128xf32>
    %cst_11 = arith.constant 0.000000e+00 : f32
    %13 = vector.broadcast %cst_11 : f32 to vector<8x128xf32>
    %14 = arith.maximumf %12, %13 : vector<8x128xf32>
    %c0_12 = arith.constant 0 : index
    %c0_13 = arith.constant 0 : index
    %15 = vector.load %arg6[%c0_12, %c0_13] : memref<128x4xf32, #tpu.memory_space<vmem>>, vector<128x4xf32>
    %cst_14 = arith.constant dense<0.000000e+00> : vector<8x4xf32>
    %16 = tpu.matmul %14, %15, %cst_14 {dimension_numbers = #tpu.dot_dimension_numbers<[1], [0], [0], [1], [0, 0, 1, 1], [], []>} : vector<8x128xf32>, vector<128x4xf32>, vector<8x4xf32> -> vector<8x4xf32>
    %c0_15 = arith.constant 0 : index
    %c0_16 = arith.constant 0 : index
    %17 = vector.load %arg7[%c0_15, %c0_16] : memref<1x4xf32, #tpu.memory_space<vmem>>, vector<1x4xf32>
    %18 = vector.broadcast %17 : vector<1x4xf32> to vector<8x4xf32>
    %19 = arith.addf %16, %18 : vector<8x4xf32>
    %c0_17 = arith.constant 0 : index
    %c0_18 = arith.constant 0 : index
    %20 = vector.load %arg8[%c0_17, %c0_18] : memref<8x4xf32, #tpu.memory_space<vmem>>, vector<8x4xf32>
    tpu.vector_store %arg8[%c0_17, %c0_18], %19 {strides = array<i32>} : memref<8x4xf32, #tpu.memory_space<vmem>>, vector<8x4xf32>,
    return
  }
  func.func @transform_0(%arg0: i32) -> (i32, i32) {
    %c0_i32 = arith.constant 0 : i32
    %c0_i32_0 = arith.constant 0 : i32
    return %arg0, %c0_i32 : i32, i32
  }
  func.func @transform_1(%arg0: i32) -> (i32, i32) {
    %c0_i32 = arith.constant 0 : i32
    %c0_i32_0 = arith.constant 0 : i32
    %c0_i32_1 = arith.constant 0 : i32
    return %c0_i32, %c0_i32_0 : i32, i32
  }
  func.func @transform_2(%arg0: i32) -> (i32, i32) {
    %c0_i32 = arith.constant 0 : i32
    %c0_i32_0 = arith.constant 0 : i32
    %c0_i32_1 = arith.constant 0 : i32
    return %c0_i32, %c0_i32_0 : i32, i32
  }
  func.func @transform_3(%arg0: i32) -> (i32, i32) {
    %c0_i32 = arith.constant 0 : i32
    %c0_i32_0 = arith.constant 0 : i32
    %c0_i32_1 = arith.constant 0 : i32
    return %c0_i32, %c0_i32_0 : i32, i32
  }
  func.func @transform_4(%arg0: i32) -> (i32, i32) {
    %c0_i32 = arith.constant 0 : i32
    %c0_i32_0 = arith.constant 0 : i32
    %c0_i32_1 = arith.constant 0 : i32
    return %c0_i32, %c0_i32_0 : i32, i32
  }
  func.func @transform_5(%arg0: i32) -> (i32, i32) {
    %c0_i32 = arith.constant 0 : i32
    %c0_i32_0 = arith.constant 0 : i32
    %c0_i32_1 = arith.constant 0 : i32
    return %c0_i32, %c0_i32_0 : i32, i32
  }
  func.func @transform_6(%arg0: i32) -> (i32, i32) {
    %c0_i32 = arith.constant 0 : i32
    %c0_i32_0 = arith.constant 0 : i32
    %c0_i32_1 = arith.constant 0 : i32
    return %c0_i32, %c0_i32_0 : i32, i32
  }
  func.func @transform_7(%arg0: i32) -> (i32, i32) {
    %c0_i32 = arith.constant 0 : i32
    %c0_i32_0 = arith.constant 0 : i32
    return %arg0, %c0_i32 : i32, i32
  }
}

</mosaic_0001>

<llo_original>
// kernel: tpu_custom_call.1
$region0: #{tpu_custom_call.1}
  #allocation0 [shape = 'u32[]', space=smem, size = 0x4, offset = 0x4, fixed_abs, tag = 'smem constant byte address 0x4 - core index']
  #allocation1 [shape = 'u32[72,128]{1,0:T(1,128)}', space=vmem, size = 0x9000, scoped, tag = 'internal scratch']
  %s0 = inlined_call_operand.hbm [shape: f32[8,32], index: 0, kind: input, shape index: {}]
  %s1 = inlined_call_operand.hbm [shape: f32[32,128], index: 1, kind: input, shape index: {}]
  %s2 = inlined_call_operand.vmem [shape: f32[1,128], index: 2, kind: input, shape index: {}]
  %s3 = inlined_call_operand.vmem [shape: f32[128,128], index: 3, kind: input, shape index: {}]
  %s4 = inlined_call_operand.vmem [shape: f32[1,128], index: 4, kind: input, shape index: {}]
  %s5 = inlined_call_operand.vmem [shape: f32[128,4], index: 5, kind: input, shape index: {}]
  %s6 = inlined_call_operand.vmem [shape: f32[1,4], index: 6, kind: input, shape index: {}]
  %s7 = inlined_call_operand.vmem [shape: f32[8,4], index: 7, kind: output, shape index: {}]
  %s8 = sld [smem:[#allocation0]]
  $region46: #{tpu_custom_call.1} parent=0
    _
  %s10 = ssub.s32 1, %s8
  %s11 = scalar_select 0, %s10, %s8
  $region1: #{tpu_custom_call.1} parent=0
    #allocation2 [shape = 'u8[4096]{0}', space=vmem, size = 0x1000, scoped, tag = 'input window, operand 0, single buffered']
    #allocation3 [shape = 's32[1]{0}', space=sflag, size = 0x4, scoped, tag = 'scoped memory for tpu_custom_call.1']
    #allocation4 [shape = 'u8[16384]{0}', space=vmem, size = 0x4000, scoped, tag = 'input window, operand 1, single buffered']
    #allocation5 [shape = 's32[1]{0}', space=sflag, size = 0x4, scoped, tag = 'scoped memory for tpu_custom_call.1']
    %12 = vsyncpa [#allocation3], 0
    %13 = vsyncpa [#allocation5], 0
    // Predicated region
    $region2: #{tpu_custom_call.1} parent=1 // pred_check
      _
    $region3: #{tpu_custom_call.1} parent=1 // pred_check_branch
      %15 = sbr.rel (0) target = $region5
    $region4: #{tpu_custom_call.1} parent=1 // pred_region
      %17 = vsyncadd [#allocation3], 0
      %s19 = sshll.u32 %s0, 4
      %s20 = int_to_ptr.hbm [resolvable:$true] %s19
      %s21 = sshll.u32 [#allocation2], 4
      %s22 = int_to_ptr.vmem [resolvable:$true] %s21
      %24 = dma.hbm_to_vmem [thread:$0]  %s20, 128, %s22, [#allocation3]
    $region5: #{tpu_custom_call.1} parent=1 // pred_fallthru
      _
    // Predicated region
    $region6: #{tpu_custom_call.1} parent=1 // pred_check
      _
    $region7: #{tpu_custom_call.1} parent=1 // pred_check_branch
      %26 = sbr.rel (0) target = $region9
    $region8: #{tpu_custom_call.1} parent=1 // pred_region
      %28 = vsyncadd [#allocation5], 0
      %s29 = sshll.u32 %s1, 4
      %s30 = int_to_ptr.hbm [resolvable:$true] %s29
      %s31 = sshll.u32 [#allocation4], 4
      %s32 = int_to_ptr.vmem [resolvable:$true] %s31
      %37 = dma.hbm_to_vmem [thread:$0]  %s30, 512, %s32, [#allocation5], 128, 128, 8
    $region9: #{tpu_custom_call.1} parent=1 // pred_fallthru
      _
    // Predicated region
    $region10: #{tpu_custom_call.1} parent=1 // pred_check
      _
    $region11: #{tpu_custom_call.1} parent=1 // pred_check_branch
      %39 = sbr.rel (0) target = $region13
    $region12: #{tpu_custom_call.1} parent=1 // pred_region
      _
    $region13: #{tpu_custom_call.1} parent=1 // pred_fallthru
      _
    // Predicated region
    $region14: #{tpu_custom_call.1} parent=1 // pred_check
      _
    $region15: #{tpu_custom_call.1} parent=1 // pred_check_branch
      %41 = sbr.rel (0) target = $region17
    $region16: #{tpu_custom_call.1} parent=1 // pred_region
      _
    $region17: #{tpu_custom_call.1} parent=1 // pred_fallthru
      _
    // Predicated region
    $region18: #{tpu_custom_call.1} parent=1 // pred_check
      _
    $region19: #{tpu_custom_call.1} parent=1 // pred_check_branch
      %43 = sbr.rel (0) target = $region21
    $region20: #{tpu_custom_call.1} parent=1 // pred_region
      _
    $region21: #{tpu_custom_call.1} parent=1 // pred_fallthru
      _
    // Predicated region
    $region22: #{tpu_custom_call.1} parent=1 // pred_check
      _
    $region23: #{tpu_custom_call.1} parent=1 // pred_check_branch
      %45 = sbr.rel (0) target = $region25
    $region24: #{tpu_custom_call.1} parent=1 // pred_region
      _
    $region25: #{tpu_custom_call.1} parent=1 // pred_fallthru
      _
    // Predicated region
    $region26: #{tpu_custom_call.1} parent=1 // pred_check
      _
    $region27: #{tpu_custom_call.1} parent=1 // pred_check_branch
      %47 = sbr.rel (0) target = $region29
    $region28: #{tpu_custom_call.1} parent=1 // pred_region
      _
    $region29: #{tpu_custom_call.1} parent=1 // pred_fallthru
      _
    // Predicated region
    $region30: #{tpu_custom_call.1} parent=1 // pred_check
      _
    $region31: #{tpu_custom_call.1} parent=1 // pred_check_branch
      %49 = sbr.rel (0) target = $region33
    $region32: #{tpu_custom_call.1} parent=1 // pred_region
      %51 = dma.done [#allocation3], 128
    $region33: #{tpu_custom_call.1} parent=1 // pred_fallthru
      _
    // Predicated region
    $region34: #{tpu_custom_call.1} parent=1 // pred_check
      _
    $region35: #{tpu_custom_call.1} parent=1 // pred_check_branch
      %53 = sbr.rel (0) target = $region37
    $region36: #{tpu_custom_call.1} parent=1 // pred_region
      %55 = dma.done [#allocation5], 512
    $region37: #{tpu_custom_call.1} parent=1 // pred_fallthru
      _
    %v56 = vld [vmem:[#allocation2] sm:$0xff]
    %v57 = vld [vmem:[#allocation4] sm:$0xff]
    %v58 = vld [vmem:[#allocation4 + $0x8] sm:$0xff]
    %v59 = vld [vmem:[#allocation4 + $0x10] sm:$0xff]
    %v60 = vld [vmem:[#allocation4 + $0x18] sm:$0xff]
    %v61 = vld [vmem:[%s2] sm:$0x1]
    %v63 = vperm.slane %v61, 0
    %vm65 = vcmask 261120
    %v67 = vsel %vm65, %v56, 0
    %69 = vmatpush.msra.mxu0 0.0
    %70 = vmatpush.msra.mxu0 0.0
    %71 = vmatpush.msra.mxu0 0.0
    %72 = vmatpush.msra.mxu0 0.0
    %73 = vmatpush.msra.mxu0 0.0
    %74 = vmatpush.msra.mxu0 0.0
    %75 = vmatpush.msra.mxu0 0.0
    %76 = vmatpush.msra.mxu0 0.0
    %77 = vmatpush.msra.mxu0 0.0
    %78 = vmatpush.msra.mxu0 0.0
    %79 = vmatpush.msra.mxu0 0.0
    %80 = vmatpush.msra.mxu0 0.0
    %81 = vmatpush.msra.mxu0 %v60
    %82 = vmatpush.msra.mxu0 %v59
    %83 = vmatpush.msra.mxu0 %v58
    %84 = vmatpush.msra.mxu0 %v57
    %85 = vmatmul.f32.gmra.mxu0 %v67
    %v86 = vpop.f32.mrf.mxu0
    %v87 = vadd.f32 %v63, %v86
    %88 = vdwg.mxu0
    %v89 = vmax.f32 %v87, 0.0
    %v90 = vld [vmem:[%s3] sm:$0xff]
    %v91 = vld [vmem:[%s3 + $0x8] sm:$0xff]
    %v92 = vld [vmem:[%s3 + $0x10] sm:$0xff]
    %v93 = vld [vmem:[%s3 + $0x18] sm:$0xff]
    %v94 = vld [vmem:[%s3 + $0x20] sm:$0xff]
    %v95 = vld [vmem:[%s3 + $0x28] sm:$0xff]
    %v96 = vld [vmem:[%s3 + $0x30] sm:$0xff]
    %v97 = vld [vmem:[%s3 + $0x38] sm:$0xff]
    %v98 = vld [vmem:[%s3 + $0x40] sm:$0xff]
    %v99 = vld [vmem:[%s3 + $0x48] sm:$0xff]
    %v100 = vld [vmem:[%s3 + $0x50] sm:$0xff]
    %v101 = vld [vmem:[%s3 + $0x58] sm:$0xff]
    %v102 = vld [vmem:[%s3 + $0x60] sm:$0xff]
    %v103 = vld [vmem:[%s3 + $0x68] sm:$0xff]
    %v104 = vld [vmem:[%s3 + $0x70] sm:$0xff]
    %v105 = vld [vmem:[%s3 + $0x78] sm:$0xff]
    %v106 = vld [vmem:[%s4] sm:$0x1]
    %v108 = vperm.slane %v106, 0
    %110 = vmatpush.msra.mxu0 %v105
    %111 = vmatpush.msra.mxu0 %v104
    %112 = vmatpush.msra.mxu0 %v103
    %113 = vmatpush.msra.mxu0 %v102
    %114 = vmatpush.msra.mxu0 %v101
    %115 = vmatpush.msra.mxu0 %v100
    %116 = vmatpush.msra.mxu0 %v99
    %117 = vmatpush.msra.mxu0 %v98
    %118 = vmatpush.msra.mxu0 %v97
    %119 = vmatpush.msra.mxu0 %v96
    %120 = vmatpush.msra.mxu0 %v95
    %121 = vmatpush.msra.mxu0 %v94
    %122 = vmatpush.msra.mxu0 %v93
    %123 = vmatpush.msra.mxu0 %v92
    %124 = vmatpush.msra.mxu0 %v91
    %125 = vmatpush.msra.mxu0 %v90
    %126 = vmatmul.f32.gmra.mxu0 %v89
    %v127 = vpop.f32.mrf.mxu0
    %v128 = vadd.f32 %v108, %v127
    %129 = vdwg.mxu0
    %v130 = vmax.f32 %v128, 0.0
    %v131 = vld [vmem:[%s5] sm:$0xff]
    %v132 = vld [vmem:[%s5 + $0x8] sm:$0xff]
    %v133 = vld [vmem:[%s5 + $0x10] sm:$0xff]
    %v134 = vld [vmem:[%s5 + $0x18] sm:$0xff]
    %v135 = vld [vmem:[%s5 + $0x20] sm:$0xff]
    %v136 = vld [vmem:[%s5 + $0x28] sm:$0xff]
    %v137 = vld [vmem:[%s5 + $0x30] sm:$0xff]
    %v138 = vld [vmem:[%s5 + $0x38] sm:$0xff]
    %v139 = vld [vmem:[%s5 + $0x40] sm:$0xff]
    %v140 = vld [vmem:[%s5 + $0x48] sm:$0xff]
    %v141 = vld [vmem:[%s5 + $0x50] sm:$0xff]
    %v142 = vld [vmem:[%s5 + $0x58] sm:$0xff]
    %v143 = vld [vmem:[%s5 + $0x60] sm:$0xff]
    %v144 = vld [vmem:[%s5 + $0x68] sm:$0xff]
    %v145 = vld [vmem:[%s5 + $0x70] sm:$0xff]
    %v146 = vld [vmem:[%s5 + $0x78] sm:$0xff]
    %v147 = vld [vmem:[%s6] sm:$0x1]
    %v149 = vperm.slane %v147, 0
    %151 = vmatpush.msra.mxu0 %v146
    %152 = vmatpush.msra.mxu0 %v145
    %153 = vmatpush.msra.mxu0 %v144
    %154 = vmatpush.msra.mxu0 %v143
    %155 = vmatpush.msra.mxu0 %v142
    %156 = vmatpush.msra.mxu0 %v141
    %157 = vmatpush.msra.mxu0 %v140
    %158 = vmatpush.msra.mxu0 %v139
    %159 = vmatpush.msra.mxu0 %v138
    %160 = vmatpush.msra.mxu0 %v137
    %161 = vmatpush.msra.mxu0 %v136
    %162 = vmatpush.msra.mxu0 %v135
    %163 = vmatpush.msra.mxu0 %v134
    %164 = vmatpush.msra.mxu0 %v133
    %165 = vmatpush.msra.mxu0 %v132
    %166 = vmatpush.msra.mxu0 %v131
    %167 = vmatmul.f32.gmra.mxu0 %v130
    %v168 = vpop.f32.mrf.mxu0
    %v169 = vadd.f32 %v149, %v168
    %170 = vdwg.mxu0
    %vm171 = vcmask 31744
    %172 = vst.msk [vmem:[%s7] sm:$0xff] %vm171, %v169
    // Predicated region
    $region38: #{tpu_custom_call.1} parent=1 // pred_check
      _
    $region39: #{tpu_custom_call.1} parent=1 // pred_check_branch
      %174 = sbr.rel (0) target = $region41
    $region40: #{tpu_custom_call.1} parent=1 // pred_region
      _
    $region41: #{tpu_custom_call.1} parent=1 // pred_fallthru
      _
    // Predicated region
    $region42: #{tpu_custom_call.1} parent=1 // pred_check
      _
    $region43: #{tpu_custom_call.1} parent=1 // pred_check_branch
      %176 = sbr.rel (0) target = $region45
    $region44: #{tpu_custom_call.1} parent=1 // pred_region
      _
    $region45: #{tpu_custom_call.1} parent=1 // pred_fallthru
      _
    %177 = vsyncpa [#allocation3], 1
    %178 = vsyncpa [#allocation5], 1

</llo_original>
